<compile_context>
chip_gen: v5e
topology: v5e:2x2
jax: 0.10.0
libtpu: 0.0.40
codegen_flags: <defaults>
</compile_context>

<pallas_src>
import jax
import jax.numpy as jnp
from jax.experimental import pallas as pl
from jax.experimental.pallas import tpu as pltpu


# ----------------------------------------------------------------------------
# Single fused kernel:
#   y     = relu(x @ WlT + bl)                 (VPU FMAs, K = F_in = 2)
#   v3    = y.T                                (the "linear+permute" output)
#   gates = y @ WihT + (b_ih + b_hh)           (VPU FMAs, K = F_out = 2)
#   i,g,o = sigmoid/tanh slices of gates       (whole-tile EUP, slice once)
#   c_new = i * g            (f * c0 == 0 since c0 == 0)
#   h_new = o * tanh(c_new)
# ----------------------------------------------------------------------------
def fused_linear_relu_permute_lstm_kernel(x_ref, wlT_ref, bl_ref,
                                          wihT_ref, bg_ref,
                                          v3_ref, h_ref, c_ref):
    x = x_ref[...]                      # (S, F_in)
    wlT = wlT_ref[...]                  # (F_in, F_out)   (pre-transposed)
    wihT = wihT_ref[...]                # (F_out, 4H)     (pre-transposed)

    f_in = x.shape[1]
    f_out = wlT.shape[1]

    # --- linear + relu: unrolled broadcast-multiply-add on the VPU ----------
    y = bl_ref[...]                     # (1, F_out) broadcasts up to (S, F_out)
    for k in range(f_in):               # static unroll, K = 2
        y = y + x[:, k:k + 1] * wlT[k:k + 1, :]
    y = jnp.maximum(y, 0.0)             # relu, (S, F_out)

    # --- permuted v3 output (the only place the transpose is needed) -------
    v3_ref[...] = y.T                   # (F_out, S)

    # --- LSTM gates: unrolled VPU FMAs, zero initial state folded away -----
    gates = bg_ref[...]                 # (1, 4H) = b_ih + b_hh, broadcasts
    for k in range(f_out):              # static unroll, K = 2
        gates = gates + y[:, k:k + 1] * wihT[k:k + 1, :]
    # gates: (S, 4H); gate order i, f, g, o as in torch.nn.LSTMCell

    sg = jax.nn.sigmoid(gates)          # whole-tile EUP pass
    th = jnp.tanh(gates)                # whole-tile EUP pass

    hdim = h_ref.shape[1]
    i = sg[:, 0 * hdim:1 * hdim]
    g = th[:, 2 * hdim:3 * hdim]
    o = sg[:, 3 * hdim:4 * hdim]
    # f gate is multiplied by c0 == 0, so it drops out entirely.

    c_new = i * g
    h_new = o * jnp.tanh(c_new)

    h_ref[...] = h_new
    c_ref[...] = c_new


def model_forward(x, params):
    """x: (B, S, F_in) with B == 1 (matches the PyTorch input (1, 3, 2)).

    Returns (v3, (h, c)) where v3 has shape (B, F_out, S) and h, c have shape
    (B*S, H), matching the documented (B*S, F_out) LSTMCell interpretation.
    """
    B, S, Fin = x.shape
    Fout = params["lin_w"].shape[0]
    H = params["w_hh"].shape[1]
    N = B * S

    x2d = x.reshape(N, Fin)
    wlT = params["lin_w"].T                                   # (Fin, Fout)
    bl = params["lin_b"].reshape(1, Fout)
    wihT = params["w_ih"].T                                   # (Fout, 4H)
    bg = (params["b_ih"] + params["b_hh"]).reshape(1, 4 * H)  # combined bias
    # params["w_hh"] is not needed: h0 == 0 makes h0 @ W_hh^T identically 0.

    v3_2d, h, c = pl.pallas_call(
        fused_linear_relu_permute_lstm_kernel,
        out_shape=(jax.ShapeDtypeStruct((Fout, N), jnp.float32),
                   jax.ShapeDtypeStruct((N, H), jnp.float32),
                   jax.ShapeDtypeStruct((N, H), jnp.float32)),
        in_specs=[pl.BlockSpec(memory_space=pltpu.MemorySpace.VMEM)] * 5,
        out_specs=(pl.BlockSpec(memory_space=pltpu.MemorySpace.VMEM),) * 3,
    )(x2d, wlT, bl, wihT, bg)

    v3 = v3_2d.reshape(B, Fout, S)      # B == 1, so N == S
    return v3, (h, c)


if __name__ == "__main__":
    key = jax.random.PRNGKey(0)
    kx, k1, k2, k3, k4, k5, k6 = jax.random.split(key, 7)

    B, S, F_IN, F_OUT, HID = 1, 3, 2, 2, 2

    # Input (matches the module's x1 = torch.randn(1, 3, 2)).
    x = jax.random.normal(kx, (B, S, F_IN), dtype=jnp.float32)

    # Linear(2, 2) params, deterministic init (uniform +/- 1/sqrt(fan_in)).
    klin = 1.0 / jnp.sqrt(jnp.float32(F_IN))
    lin_w = jax.random.uniform(k1, (F_OUT, F_IN), jnp.float32, -klin, klin)
    lin_b = jax.random.uniform(k2, (F_OUT,), jnp.float32, -klin, klin)

    # LSTMCell(2, 2) params, deterministic init (uniform +/- 1/sqrt(hidden)).
    klstm = 1.0 / jnp.sqrt(jnp.float32(HID))
    w_ih = jax.random.uniform(k3, (4 * HID, F_IN), jnp.float32, -klstm, klstm)
    w_hh = jax.random.uniform(k4, (4 * HID, HID), jnp.float32, -klstm, klstm)
    b_ih = jax.random.uniform(k5, (4 * HID,), jnp.float32, -klstm, klstm)
    b_hh = jax.random.uniform(k6, (4 * HID,), jnp.float32, -klstm, klstm)

    params = dict(lin_w=lin_w, lin_b=lin_b,
                  w_ih=w_ih, w_hh=w_hh, b_ih=b_ih, b_hh=b_hh)

    v3, (h, c) = model_forward(x, params)
    jax.block_until_ready((v3, h, c))

    assert v3.shape == (B, F_OUT, S)
    assert h.shape == (B * S, HID) and c.shape == (B * S, HID)
    print("KERNEL_OK")
</pallas_src>

<mosaic_0001>
module attributes {stable_mosaic.version = 11 : i64} {
  func.func @fused_linear_relu_permute_lstm_kernel(%arg0: memref<3x2xf32, #tpu.memory_space<vmem>>, %arg1: memref<2x2xf32, #tpu.memory_space<vmem>>, %arg2: memref<1x2xf32, #tpu.memory_space<vmem>>, %arg3: memref<2x8xf32, #tpu.memory_space<vmem>>, %arg4: memref<1x8xf32, #tpu.memory_space<vmem>>, %arg5: memref<2x3xf32, #tpu.memory_space<vmem>>, %arg6: memref<3x2xf32, #tpu.memory_space<vmem>>, %arg7: memref<3x2xf32, #tpu.memory_space<vmem>>) attributes {dimension_semantics = [], scalar_prefetch = 0 : i64, scratch_operands = 0 : i64, tpu.core_type = #tpu.core_type<tc>} {
    %c0 = arith.constant 0 : index
    %c0_0 = arith.constant 0 : index
    %0 = vector.load %arg0[%c0, %c0_0] : memref<3x2xf32, #tpu.memory_space<vmem>>, vector<3x2xf32>
    %c0_1 = arith.constant 0 : index
    %c0_2 = arith.constant 0 : index
    %1 = vector.load %arg1[%c0_1, %c0_2] : memref<2x2xf32, #tpu.memory_space<vmem>>, vector<2x2xf32>
    %c0_3 = arith.constant 0 : index
    %c0_4 = arith.constant 0 : index
    %2 = vector.load %arg3[%c0_3, %c0_4] : memref<2x8xf32, #tpu.memory_space<vmem>>, vector<2x8xf32>
    %c0_5 = arith.constant 0 : index
    %c0_6 = arith.constant 0 : index
    %3 = vector.load %arg2[%c0_5, %c0_6] : memref<1x2xf32, #tpu.memory_space<vmem>>, vector<1x2xf32>
    %4 = vector.extract_strided_slice %0 {offsets = [0, 0], sizes = [3, 1], strides = [1, 1]} : vector<3x2xf32> to vector<3x1xf32>
    %5 = vector.extract_strided_slice %1 {offsets = [0, 0], sizes = [1, 2], strides = [1, 1]} : vector<2x2xf32> to vector<1x2xf32>
    %6 = vector.broadcast %4 : vector<3x1xf32> to vector<3x2xf32>
    %7 = vector.broadcast %5 : vector<1x2xf32> to vector<3x2xf32>
    %8 = arith.mulf %6, %7 : vector<3x2xf32>
    %9 = vector.broadcast %3 : vector<1x2xf32> to vector<3x2xf32>
    %10 = arith.addf %9, %8 : vector<3x2xf32>
    %11 = vector.extract_strided_slice %0 {offsets = [0, 1], sizes = [3, 1], strides = [1, 1]} : vector<3x2xf32> to vector<3x1xf32>
    %12 = vector.extract_strided_slice %1 {offsets = [1, 0], sizes = [1, 2], strides = [1, 1]} : vector<2x2xf32> to vector<1x2xf32>
    %13 = vector.broadcast %11 : vector<3x1xf32> to vector<3x2xf32>
    %14 = vector.broadcast %12 : vector<1x2xf32> to vector<3x2xf32>
    %15 = arith.mulf %13, %14 : vector<3x2xf32>
    %16 = arith.addf %10, %15 : vector<3x2xf32>
    %cst = arith.constant 0.000000e+00 : f32
    %17 = vector.broadcast %cst : f32 to vector<3x2xf32>
    %18 = arith.maximumf %16, %17 : vector<3x2xf32>
    %19 = tpu.transpose %18, [1, 0] : vector<3x2xf32> -> vector<2x3xf32>
    %c0_7 = arith.constant 0 : index
    %c0_8 = arith.constant 0 : index
    %20 = vector.load %arg5[%c0_7, %c0_8] : memref<2x3xf32, #tpu.memory_space<vmem>>, vector<2x3xf32>
    tpu.vector_store %arg5[%c0_7, %c0_8], %19 {strides = array<i32>} : memref<2x3xf32, #tpu.memory_space<vmem>>, vector<2x3xf32>,
    %c0_9 = arith.constant 0 : index
    %c0_10 = arith.constant 0 : index
    %21 = vector.load %arg4[%c0_9, %c0_10] : memref<1x8xf32, #tpu.memory_space<vmem>>, vector<1x8xf32>
    %22 = vector.extract_strided_slice %18 {offsets = [0, 0], sizes = [3, 1], strides = [1, 1]} : vector<3x2xf32> to vector<3x1xf32>
    %23 = vector.extract_strided_slice %2 {offsets = [0, 0], sizes = [1, 8], strides = [1, 1]} : vector<2x8xf32> to vector<1x8xf32>
    %24 = vector.broadcast %22 : vector<3x1xf32> to vector<3x8xf32>
    %25 = vector.broadcast %23 : vector<1x8xf32> to vector<3x8xf32>
    %26 = arith.mulf %24, %25 : vector<3x8xf32>
    %27 = vector.broadcast %21 : vector<1x8xf32> to vector<3x8xf32>
    %28 = arith.addf %27, %26 : vector<3x8xf32>
    %29 = vector.extract_strided_slice %18 {offsets = [0, 1], sizes = [3, 1], strides = [1, 1]} : vector<3x2xf32> to vector<3x1xf32>
    %30 = vector.extract_strided_slice %2 {offsets = [1, 0], sizes = [1, 8], strides = [1, 1]} : vector<2x8xf32> to vector<1x8xf32>
    %31 = vector.broadcast %29 : vector<3x1xf32> to vector<3x8xf32>
    %32 = vector.broadcast %30 : vector<1x8xf32> to vector<3x8xf32>
    %33 = arith.mulf %31, %32 : vector<3x8xf32>
    %34 = arith.addf %28, %33 : vector<3x8xf32>
    %35 = arith.negf %34 : vector<3x8xf32>
    %36 = math.exp %35 : vector<3x8xf32>
    %cst_11 = arith.constant 1.000000e+00 : f32
    %37 = vector.broadcast %cst_11 : f32 to vector<3x8xf32>
    %38 = arith.addf %37, %36 : vector<3x8xf32>
    %39 = arith.divf %37, %38 : vector<3x8xf32>
    %40 = math.tanh %34 : vector<3x8xf32>
    %41 = vector.extract_strided_slice %39 {offsets = [0, 0], sizes = [3, 2], strides = [1, 1]} : vector<3x8xf32> to vector<3x2xf32>
    %42 = vector.extract_strided_slice %40 {offsets = [0, 4], sizes = [3, 2], strides = [1, 1]} : vector<3x8xf32> to vector<3x2xf32>
    %43 = vector.extract_strided_slice %39 {offsets = [0, 6], sizes = [3, 2], strides = [1, 1]} : vector<3x8xf32> to vector<3x2xf32>
    %44 = arith.mulf %41, %42 : vector<3x2xf32>
    %45 = math.tanh %44 : vector<3x2xf32>
    %46 = arith.mulf %43, %45 : vector<3x2xf32>
    %c0_12 = arith.constant 0 : index
    %c0_13 = arith.constant 0 : index
    %47 = vector.load %arg6[%c0_12, %c0_13] : memref<3x2xf32, #tpu.memory_space<vmem>>, vector<3x2xf32>
    tpu.vector_store %arg6[%c0_12, %c0_13], %46 {strides = array<i32>} : memref<3x2xf32, #tpu.memory_space<vmem>>, vector<3x2xf32>,
    %c0_14 = arith.constant 0 : index
    %c0_15 = arith.constant 0 : index
    %48 = vector.load %arg7[%c0_14, %c0_15] : memref<3x2xf32, #tpu.memory_space<vmem>>, vector<3x2xf32>
    tpu.vector_store %arg7[%c0_14, %c0_15], %44 {strides = array<i32>} : memref<3x2xf32, #tpu.memory_space<vmem>>, vector<3x2xf32>,
    return
  }
}

</mosaic_0001>

<llo_original>
// kernel: tpu_custom_call.1
$region0: #{tpu_custom_call.1}
  #allocation0 [shape = 'u32[]', space=smem, size = 0x4, offset = 0x4, fixed_abs, tag = 'smem constant byte address 0x4 - core index']
  #allocation1 [shape = 'u32[72,128]{1,0:T(1,128)}', space=vmem, size = 0x9000, scoped, tag = 'internal scratch']
  %s0 = inlined_call_operand.vmem [shape: f32[3,2], index: 0, kind: input, shape index: {}]
  %s1 = inlined_call_operand.vmem [shape: f32[2,2], index: 1, kind: input, shape index: {}]
  %s2 = inlined_call_operand.vmem [shape: f32[1,2], index: 2, kind: input, shape index: {}]
  %s3 = inlined_call_operand.vmem [shape: f32[2,8], index: 3, kind: input, shape index: {}]
  %s4 = inlined_call_operand.vmem [shape: f32[1,8], index: 4, kind: input, shape index: {}]
  %s5 = inlined_call_operand.hbm [shape: f32[2,3], index: 5, kind: output, shape index: {0}]
  %s6 = inlined_call_operand.vmem [shape: f32[3,2], index: 6, kind: output, shape index: {1}]
  %s7 = inlined_call_operand.vmem [shape: f32[3,2], index: 7, kind: output, shape index: {2}]
  %8 = xla_tuple %s5, %s6, %s7
  %s9 = sld [smem:[#allocation0]]
  $region46: #{tpu_custom_call.1} parent=0
    _
  %s11 = ssub.s32 1, %s9
  %s12 = scalar_select 0, %s11, %s9
  $region1: #{tpu_custom_call.1} parent=0
    #allocation2 [shape = 'u8[1024]{0}', space=vmem, size = 0x400, scoped, tag = 'output window, operand 0, single buffered']
    #allocation3 [shape = 's32[1]{0}', space=sflag, size = 0x4, scoped, tag = 'scoped memory for tpu_custom_call.1']
    %13 = vsyncpa [#allocation3], 0
    // Predicated region
    $region2: #{tpu_custom_call.1} parent=1 // pred_check
      _
    $region3: #{tpu_custom_call.1} parent=1 // pred_check_branch
      %15 = sbr.rel (0) target = $region5
    $region4: #{tpu_custom_call.1} parent=1 // pred_region
      _
    $region5: #{tpu_custom_call.1} parent=1 // pred_fallthru
      _
    // Predicated region
    $region6: #{tpu_custom_call.1} parent=1 // pred_check
      _
    $region7: #{tpu_custom_call.1} parent=1 // pred_check_branch
      %17 = sbr.rel (0) target = $region9
    $region8: #{tpu_custom_call.1} parent=1 // pred_region
      _
    $region9: #{tpu_custom_call.1} parent=1 // pred_fallthru
      _
    // Predicated region
    $region10: #{tpu_custom_call.1} parent=1 // pred_check
      _
    $region11: #{tpu_custom_call.1} parent=1 // pred_check_branch
      %19 = sbr.rel (0) target = $region13
    $region12: #{tpu_custom_call.1} parent=1 // pred_region
      _
    $region13: #{tpu_custom_call.1} parent=1 // pred_fallthru
      _
    // Predicated region
    $region14: #{tpu_custom_call.1} parent=1 // pred_check
      _
    $region15: #{tpu_custom_call.1} parent=1 // pred_check_branch
      %21 = sbr.rel (0) target = $region17
    $region16: #{tpu_custom_call.1} parent=1 // pred_region
      _
    $region17: #{tpu_custom_call.1} parent=1 // pred_fallthru
      _
    // Predicated region
    $region18: #{tpu_custom_call.1} parent=1 // pred_check
      _
    $region19: #{tpu_custom_call.1} parent=1 // pred_check_branch
      %23 = sbr.rel (0) target = $region21
    $region20: #{tpu_custom_call.1} parent=1 // pred_region
      _
    $region21: #{tpu_custom_call.1} parent=1 // pred_fallthru
      _
    %v24 = vld [vmem:[%s0] sm:$0x7]
    %v25 = vld [vmem:[%s1] sm:$0x3]
    %v26 = vld [vmem:[%s3] sm:$0x3]
    %v27 = vld [vmem:[%s2] sm:$0x1]
    %29 = vset.pattern.permute.xlu0 0
    %30 = vperm.xlu0 %29, %v24
    %v31 = vpop.permute.xlu0 %30
    %v33 = vperm.slane %v25, 0
    %v34 = vmul.f32 %v31, %v33
    %v36 = vperm.slane %v27, 0
    %v38 = vadd.f32 %v36, %v34
    %39 = vset.pattern.permute.xlu0 1
    %40 = vperm.xlu0 %39, %v24
    %v41 = vpop.permute.xlu0 %40
    %v43 = vperm.slane %v25, 1
    %v44 = vmul.f32 %v41, %v43
    %v45 = vadd.f32 %v38, %v44
    %v46 = vmax.f32 %v45, 0.0
    %47 = vxpose.xlu0.b32.start [1/16] %v46, 128
    %48 = vxpose.xlu0.b32.cont [2/16] 0.0, 128
    %49 = vxpose.xlu0.b32.cont [3/16] 0.0, 128
    %50 = vxpose.xlu0.b32.cont [4/16] 0.0, 128
    %51 = vxpose.xlu0.b32.cont [5/16] 0.0, 128
    %52 = vxpose.xlu0.b32.cont [6/16] 0.0, 128
    %53 = vxpose.xlu0.b32.cont [7/16] 0.0, 128
    %54 = vxpose.xlu0.b32.cont [8/16] 0.0, 128
    %55 = vxpose.xlu0.b32.cont [9/16] 0.0, 128
    %56 = vxpose.xlu0.b32.cont [10/16] 0.0, 128
    %57 = vxpose.xlu0.b32.cont [11/16] 0.0, 128
    %58 = vxpose.xlu0.b32.cont [12/16] 0.0, 128
    %59 = vxpose.xlu0.b32.cont [13/16] 0.0, 128
    %60 = vxpose.xlu0.b32.cont [14/16] 0.0, 128
    %61 = vxpose.xlu0.b32.cont [15/16] 0.0, 128
    %62 = vxpose.xlu0.b32.end [16/16] 0.0, 128
    %v63 = vpop.trf.xlu0
    %v64 = vpop.trf.xlu0
    %v65 = vpop.trf.xlu0
    %v66 = vpop.trf.xlu0
    %v67 = vpop.trf.xlu0
    %v68 = vpop.trf.xlu0
    %v69 = vpop.trf.xlu0
    %v70 = vpop.trf.xlu0
    %v71 = vpop.trf.xlu0
    %v72 = vpop.trf.xlu0
    %v73 = vpop.trf.xlu0
    %v74 = vpop.trf.xlu0
    %v75 = vpop.trf.xlu0
    %v76 = vpop.trf.xlu0
    %v77 = vpop.trf.xlu0
    %v78 = vpop.trf.xlu0
    %vm79 = vcmask 17408
    %80 = vst.msk [vmem:[#allocation2] sm:$0x3] %vm79, %v63
    %v81 = vld [vmem:[%s4] sm:$0x1]
    %83 = vset.pattern.permute.xlu0 0
    %84 = vperm.xlu0 %83, %v46
    %v85 = vpop.permute.xlu0 %84
    %v87 = vperm.slane %v26, 0
    %v88 = vmul.f32 %v85, %v87
    %v90 = vperm.slane %v81, 0
    %v92 = vadd.f32 %v90, %v88
    %93 = vset.pattern.permute.xlu0 1
    %94 = vperm.xlu0 %93, %v46
    %v95 = vpop.permute.xlu0 %94
    %v97 = vperm.slane %v26, 1
    %v98 = vmul.f32 %v95, %v97
    %v99 = vadd.f32 %v92, %v98
    %v100 = vxor.u32 %v99, 2147483648
    %v101 = vmul.f32 %v100, 1.442695
    %v102 = vpow.pop %v101
    %v103 = vadd.f32 %v102, 1.0
    %v104 = vrcp.pop %v103
    %v105 = vmul.f32 %v103, %v104
    %v106 = vsub.f32 1.0, %v105
    %v107 = vmul.f32 %v104, %v106
    %v108 = vadd.f32 %v104, %v107
    %vm109 = vweird.f32 %v103
    %vm110 = vweird.f32 %v104
    %vm111 = vmor %vm109, %vm110
    %v112 = vsel %vm111, %v104, %v108
    %v113 = vand.u32 2147483647, %v103
    %vm114 = vcmp.eq.f32.partialorder %v113, 8.507059e+37
    %v115 = vand.u32 %v103, 2147483648
    %v116 = vor.u32 1.1754944e-38, %v115
    %v117 = vsel %vm114, %v116, %v112
    %v118 = vmul.f32 1.0, %v117
    %v119 = vtanh.pop %v99
    %121 = vrot.lane.b32.xlu0 %v119, 124
    %v122 = vpop.permute.xlu0 %121
    %v124 = vmul.f32 %v118, %v122
    %v125 = vtanh.pop %v124
    %127 = vrot.lane.b32.xlu0 %v125, 6
    %v128 = vpop.permute.xlu0 %127
    %v130 = vmul.f32 %v118, %v128
    %132 = vrot.lane.b32.xlu0 %v130, 122
    %v133 = vpop.permute.xlu0 %132
    %vm135 = vcmask 10240
    %136 = vst.msk [vmem:[%s6] sm:$0x7] %vm135, %v133
    %137 = vst.msk [vmem:[%s7] sm:$0x7] %vm135, %v124
    // Predicated region
    $region22: #{tpu_custom_call.1} parent=1 // pred_check
      _
    $region23: #{tpu_custom_call.1} parent=1 // pred_check_branch
      %139 = sbr.rel (0) target = $region25
    $region24: #{tpu_custom_call.1} parent=1 // pred_region
      %141 = vsyncadd [#allocation3], 0
      %s143 = sshll.u32 [#allocation2], 4
      %s144 = int_to_ptr.vmem [resolvable:$true] %s143
      %s145 = sshll.u32 %s5, 4
      %s146 = int_to_ptr.hbm [resolvable:$true] %s145
      %148 = dma.vmem_to_hbm [thread:$0]  %s144, 32, %s146, [#allocation3]
    $region25: #{tpu_custom_call.1} parent=1 // pred_fallthru
      _
    // Predicated region
    $region26: #{tpu_custom_call.1} parent=1 // pred_check
      _
    $region27: #{tpu_custom_call.1} parent=1 // pred_check_branch
      %150 = sbr.rel (0) target = $region29
    $region28: #{tpu_custom_call.1} parent=1 // pred_region
      _
    $region29: #{tpu_custom_call.1} parent=1 // pred_fallthru
      _
    // Predicated region
    $region30: #{tpu_custom_call.1} parent=1 // pred_check
      _
    $region31: #{tpu_custom_call.1} parent=1 // pred_check_branch
      %152 = sbr.rel (0) target = $region33
    $region32: #{tpu_custom_call.1} parent=1 // pred_region
      _
    $region33: #{tpu_custom_call.1} parent=1 // pred_fallthru
      _
    // Predicated region
    $region34: #{tpu_custom_call.1} parent=1 // pred_check
      _
    $region35: #{tpu_custom_call.1} parent=1 // pred_check_branch
      %154 = sbr.rel (0) target = $region37
    $region36: #{tpu_custom_call.1} parent=1 // pred_region
      %156 = dma.done [#allocation3], 32
    $region37: #{tpu_custom_call.1} parent=1 // pred_fallthru
      _
    // Predicated region
    $region38: #{tpu_custom_call.1} parent=1 // pred_check
      _
    $region39: #{tpu_custom_call.1} parent=1 // pred_check_branch
      %158 = sbr.rel (0) target = $region41
    $region40: #{tpu_custom_call.1} parent=1 // pred_region
      _
    $region41: #{tpu_custom_call.1} parent=1 // pred_fallthru
      _
    // Predicated region
    $region42: #{tpu_custom_call.1} parent=1 // pred_check
      _
    $region43: #{tpu_custom_call.1} parent=1 // pred_check_branch
      %160 = sbr.rel (0) target = $region45
    $region44: #{tpu_custom_call.1} parent=1 // pred_region
      _
    $region45: #{tpu_custom_call.1} parent=1 // pred_fallthru
      _
    %161 = vsyncpa [#allocation3], 1

</llo_original>
